<compile_context>
chip_gen: v6e
topology: v6e:2x2x1
jax: 0.10.0
libtpu: 0.0.40
codegen_flags: <defaults>
</compile_context>

<pallas_src>
import functools

import jax
import jax.numpy as jnp
from jax.experimental import pallas as pl
from jax.experimental.pallas import tpu as pltpu


def quantize_mat(w):
    """Replicates torch quantize_mat: per-last-dim absmax scale, int8 truncation.

    Returns (w_q (N, K) int8, max_val (N,) w.dtype).
    NOTE: like the PyTorch reference, an all-zero row yields a 0 scale (NaN on
    dequant of that row's products); no extra clamp is added to stay faithful.
    """
    max_val = (jnp.max(jnp.abs(w), axis=-1) / 127.0).astype(w.dtype)   # (N,)
    w_q = (w / max_val[..., None]).astype(jnp.int8)                    # trunc toward 0
    return w_q, max_val


def _round_up(x, m):
    return (x + m - 1) // m * m


def _w8_linear_kernel(x_ref, wq_ref, mx_ref, b_ref, o_ref, acc_ref):
    # x_ref:   (tm, tk)  compute dtype (f32 or bf16)
    # wq_ref:  (tk, tn)  int8   (pre-transposed weight, K-major)
    # mx_ref:  (1, tn)   f32    per-output-column dequant scale
    # b_ref:   (1, tn)   f32    bias
    # o_ref:   (tm, tn)  f32
    # acc_ref: (tm, tn)  f32 VMEM scratch accumulator (lives across k steps)
    k = pl.program_id(2)

    @pl.when(k == 0)
    def _():
        acc_ref[...] = jnp.zeros_like(acc_ref)

    x_tile = x_ref[...]
    # int8 -> compute dtype is exact (|values| <= 127); dequant scale deferred.
    w_tile = wq_ref[...].astype(x_tile.dtype)
    acc_ref[...] += jnp.dot(x_tile, w_tile, preferred_element_type=jnp.float32)

    @pl.when(k == pl.num_programs(2) - 1)
    def _():
        # Epilogue: apply per-column scale and bias once, lane-dense store.
        o_ref[...] = (acc_ref[...] * mx_ref[...] + b_ref[...]).astype(o_ref.dtype)


@functools.partial(jax.jit, static_argnames=("tm", "tn", "tk", "compute_dtype"))
def w8_linear(x, weight_q_t, max_val, bias=None, *,
              tm=256, tn=256, tk=512, compute_dtype=jnp.float32):
    """Weight-only int8 quantized linear.

    x:          (..., K) float
    weight_q_t: (K, N)   int8   -- quantized weight, already transposed
    max_val:    (N,)     float  -- per-output-row dequant scale
    bias:       (N,)     float or None
    """
    *lead, K = x.shape
    Kw, N = weight_q_t.shape
    assert Kw == K, f"in_features mismatch: x has {K}, weight has {Kw}"

    x2d = x.reshape(-1, K).astype(compute_dtype)
    M = x2d.shape[0]

    mx2d = max_val.astype(jnp.float32).reshape(1, N)
    if bias is None:
        b2d = jnp.zeros((1, N), jnp.float32)
    else:
        b2d = bias.astype(jnp.float32).reshape(1, N)

    # Clamp tiles to (8, 128)-aligned sizes and pad every dim to a tile multiple.
    tm = min(tm, _round_up(M, 8))
    tk = min(tk, _round_up(K, 128))
    tn = min(tn, _round_up(N, 128))
    Mp, Kp, Np = _round_up(M, tm), _round_up(K, tk), _round_up(N, tn)

    if (Mp, Kp) != (M, K):
        x2d = jnp.pad(x2d, ((0, Mp - M), (0, Kp - K)))
    if (Kp, Np) != (K, N):
        weight_q_t = jnp.pad(weight_q_t, ((0, Kp - K), (0, Np - N)))
    if Np != N:
        mx2d = jnp.pad(mx2d, ((0, 0), (0, Np - N)))
        b2d = jnp.pad(b2d, ((0, 0), (0, Np - N)))

    grid = (Mp // tm, Np // tn, Kp // tk)   # K reduction innermost

    out = pl.pallas_call(
        _w8_linear_kernel,
        out_shape=jax.ShapeDtypeStruct((Mp, Np), jnp.float32),
        grid_spec=pltpu.PrefetchScalarGridSpec(
            num_scalar_prefetch=0,
            grid=grid,
            in_specs=[
                pl.BlockSpec((tm, tk), lambda i, j, k: (i, k)),   # x
                pl.BlockSpec((tk, tn), lambda i, j, k: (k, j)),   # W_q (K, N)
                pl.BlockSpec((1, tn), lambda i, j, k: (0, j)),    # scale row
                pl.BlockSpec((1, tn), lambda i, j, k: (0, j)),    # bias row
            ],
            out_specs=pl.BlockSpec((tm, tn), lambda i, j, k: (i, j)),
            scratch_shapes=[pltpu.VMEM((tm, tn), jnp.float32)],
        ),
        compiler_params=pltpu.CompilerParams(
            dimension_semantics=("parallel", "parallel", "arbitrary"),
            vmem_limit_bytes=48 * 1024 * 1024,   # safe on v7x's 64 MiB VMEM
        ),
    )(x2d, weight_q_t, mx2d, b2d)

    return out[:M, :N].reshape(*lead, N)


if __name__ == "__main__":
    key = jax.random.PRNGKey(0)
    k_w, k_b, k_x = jax.random.split(key, 3)

    batch, seq, in_features, out_features = 2, 8, 32, 64

    # Deterministic "origin" weight / bias (synthetic, as in W8Linear.__init__).
    origin_weight = jax.random.normal(k_w, (out_features, in_features), jnp.float32)
    bias = jax.random.normal(k_b, (out_features,), jnp.float32)
    x = jax.random.normal(k_x, (batch, seq, in_features), jnp.float32)

    # Quantize once at "init" time (plain JAX glue) and pre-transpose to (K, N).
    weight_q, max_val = quantize_mat(origin_weight)   # (N, K) int8, (N,)
    weight_q_t = weight_q.T                           # (K, N) int8, one-off

    y = w8_linear(x, weight_q_t, max_val, bias)
    jax.block_until_ready(y)

    # Reference check (dequantize in plain JAX, same math as torch forward).
    w_dq = weight_q.astype(jnp.float32) * max_val[:, None]
    y_ref = x.reshape(-1, in_features) @ w_dq.T + bias
    y_ref = y_ref.reshape(batch, seq, out_features)
    assert jnp.allclose(y, y_ref, atol=1e-3, rtol=1e-4), "mismatch vs reference"

    print("KERNEL_OK")
</pallas_src>

<mosaic_0001>
module attributes {stable_mosaic.version = 11 : i64} {
  func.func @_w8_linear_kernel(%arg0: i32, %arg1: i32, %arg2: i32, %arg3: memref<16x128xf32, #tpu.memory_space<vmem>>, %arg4: memref<128x128xi8, #tpu.memory_space<vmem>>, %arg5: memref<1x128xf32, #tpu.memory_space<vmem>>, %arg6: memref<1x128xf32, #tpu.memory_space<vmem>>, %arg7: memref<16x128xf32, #tpu.memory_space<vmem>>, %arg8: memref<16x128xf32, #tpu.memory_space<vmem>>) attributes {dimension_semantics = [#tpu.dimension_semantics<parallel>, #tpu.dimension_semantics<parallel>, #tpu.dimension_semantics<arbitrary>], iteration_bounds = array<i64: 1, 1, 1>, scalar_prefetch = 0 : i64, scratch_operands = 1 : i64, tpu.core_type = #tpu.core_type<tc>, window_params = [{transform_indices = @transform_0, window_bounds = array<i64: 16, 128>}, {transform_indices = @transform_1, window_bounds = array<i64: 128, 128>}, {transform_indices = @transform_2, window_bounds = array<i64: 1, 128>}, {transform_indices = @transform_3, window_bounds = array<i64: 1, 128>}, {transform_indices = @transform_4, window_bounds = array<i64: 16, 128>}]} {
    %c0_i32 = arith.constant 0 : i32
    %0 = arith.cmpi eq, %arg2, %c0_i32 : i32
    %1 = arith.extui %0 : i1 to i32
    %c0_i32_0 = arith.constant 0 : i32
    %2 = arith.cmpi ne, %1, %c0_i32_0 : i32
    scf.if %2 {
      %cst_10 = arith.constant 0.000000e+00 : f32
      %13 = vector.broadcast %cst_10 : f32 to vector<16x128xf32>
      %c0_11 = arith.constant 0 : index
      %c0_12 = arith.constant 0 : index
      %14 = vector.load %arg8[%c0_11, %c0_12] : memref<16x128xf32, #tpu.memory_space<vmem>>, vector<16x128xf32>
      tpu.vector_store %arg8[%c0_11, %c0_12], %13 {strides = array<i32>} : memref<16x128xf32, #tpu.memory_space<vmem>>, vector<16x128xf32>,
    } else {
    }
    %c0 = arith.constant 0 : index
    %c0_1 = arith.constant 0 : index
    %3 = vector.load %arg3[%c0, %c0_1] : memref<16x128xf32, #tpu.memory_space<vmem>>, vector<16x128xf32>
    %c0_2 = arith.constant 0 : index
    %c0_3 = arith.constant 0 : index
    %4 = vector.load %arg4[%c0_2, %c0_3] : memref<128x128xi8, #tpu.memory_space<vmem>>, vector<128x128xi8>
    %5 = arith.sitofp %4 : vector<128x128xi8> to vector<128x128xf32>
    %c0_4 = arith.constant 0 : index
    %c0_5 = arith.constant 0 : index
    %6 = vector.load %arg8[%c0_4, %c0_5] : memref<16x128xf32, #tpu.memory_space<vmem>>, vector<16x128xf32>
    %cst = arith.constant dense<0.000000e+00> : vector<16x128xf32>
    %7 = tpu.matmul %3, %5, %cst {dimension_numbers = #tpu.dot_dimension_numbers<[1], [0], [0], [1], [0, 0, 1, 1], [], []>} : vector<16x128xf32>, vector<128x128xf32>, vector<16x128xf32> -> vector<16x128xf32>
    %8 = arith.addf %6, %7 : vector<16x128xf32>
    %c0_6 = arith.constant 0 : index
    %c0_7 = arith.constant 0 : index
    %9 = vector.load %arg8[%c0_6, %c0_7] : memref<16x128xf32, #tpu.memory_space<vmem>>, vector<16x128xf32>
    tpu.vector_store %arg8[%c0_6, %c0_7], %8 {strides = array<i32>} : memref<16x128xf32, #tpu.memory_space<vmem>>, vector<16x128xf32>,
    %c0_i32_8 = arith.constant 0 : i32
    %10 = arith.cmpi eq, %arg2, %c0_i32_8 : i32
    %11 = arith.extui %10 : i1 to i32
    %c0_i32_9 = arith.constant 0 : i32
    %12 = arith.cmpi ne, %11, %c0_i32_9 : i32
    scf.if %12 {
      %c0_10 = arith.constant 0 : index
      %c0_11 = arith.constant 0 : index
      %13 = vector.load %arg8[%c0_10, %c0_11] : memref<16x128xf32, #tpu.memory_space<vmem>>, vector<16x128xf32>
      %c0_12 = arith.constant 0 : index
      %c0_13 = arith.constant 0 : index
      %14 = vector.load %arg5[%c0_12, %c0_13] : memref<1x128xf32, #tpu.memory_space<vmem>>, vector<1x128xf32>
      %15 = vector.broadcast %14 : vector<1x128xf32> to vector<16x128xf32>
      %16 = arith.mulf %13, %15 : vector<16x128xf32>
      %c0_14 = arith.constant 0 : index
      %c0_15 = arith.constant 0 : index
      %17 = vector.load %arg6[%c0_14, %c0_15] : memref<1x128xf32, #tpu.memory_space<vmem>>, vector<1x128xf32>
      %18 = vector.broadcast %17 : vector<1x128xf32> to vector<16x128xf32>
      %19 = arith.addf %16, %18 : vector<16x128xf32>
      %c0_16 = arith.constant 0 : index
      %c0_17 = arith.constant 0 : index
      %20 = vector.load %arg7[%c0_16, %c0_17] : memref<16x128xf32, #tpu.memory_space<vmem>>, vector<16x128xf32>
      tpu.vector_store %arg7[%c0_16, %c0_17], %19 {strides = array<i32>} : memref<16x128xf32, #tpu.memory_space<vmem>>, vector<16x128xf32>,
    } else {
    }
    return
  }
  func.func @transform_0(%arg0: i32, %arg1: i32, %arg2: i32) -> (i32, i32) {
    %c0_i32 = arith.constant 0 : i32
    return %arg0, %arg2 : i32, i32
  }
  func.func @transform_1(%arg0: i32, %arg1: i32, %arg2: i32) -> (i32, i32) {
    %c0_i32 = arith.constant 0 : i32
    return %arg2, %arg1 : i32, i32
  }
  func.func @transform_2(%arg0: i32, %arg1: i32, %arg2: i32) -> (i32, i32) {
    %c0_i32 = arith.constant 0 : i32
    %c0_i32_0 = arith.constant 0 : i32
    return %c0_i32, %arg1 : i32, i32
  }
  func.func @transform_3(%arg0: i32, %arg1: i32, %arg2: i32) -> (i32, i32) {
    %c0_i32 = arith.constant 0 : i32
    %c0_i32_0 = arith.constant 0 : i32
    return %c0_i32, %arg1 : i32, i32
  }
  func.func @transform_4(%arg0: i32, %arg1: i32, %arg2: i32) -> (i32, i32) {
    %c0_i32 = arith.constant 0 : i32
    return %arg0, %arg1 : i32, i32
  }
}

</mosaic_0001>

<llo_original>
// kernel: w8_linear.1
$region0: #{w8_linear.1}
  #allocation0 [shape = 'u32[]', space=smem, size = 0x4, offset = 0x4, fixed_abs, tag = 'smem constant byte address 0x4 - core index']
  #allocation1 [shape = 'u32[144,128]{1,0:T(1,128)}', space=vmem, size = 0x12000, scoped, tag = 'internal scratch']
  #allocation2 [shape = 'f32[16,128]{1,0:T(8,128)}', space=vmem, size = 0x2000, scoped, tag = 'scratch operand']
  %s0 = inlined_call_operand.vmem [shape: f32[16,128], index: 0, kind: input, shape index: {}]
  %s1 = inlined_call_operand.vmem [shape: s8[128,128], index: 1, kind: input, shape index: {}]
  %s2 = inlined_call_operand.vmem [shape: f32[1,128], index: 2, kind: input, shape index: {}]
  %s3 = inlined_call_operand.vmem [shape: f32[1,128], index: 3, kind: input, shape index: {}]
  %s4 = inlined_call_operand.vmem [shape: f32[16,128], index: 4, kind: output, shape index: {}]
  %s5 = sld [smem:[#allocation0]]
  $region34: #{w8_linear.1} parent=0
    _
  %s7 = ssub.s32 1, %s5
  %s8 = scalar_select 0, %s7, %s5
  // Predicated region
  $region2: #{w8_linear.1} parent=0 // pred_check
    _
  $region3: #{w8_linear.1} parent=0 // pred_check_branch
    %10 = sbr.rel (0) target = $region5
  $region4: #{w8_linear.1} parent=0 // pred_region
    _
  $region5: #{w8_linear.1} parent=0 // pred_fallthru
    _
  // Predicated region
  $region6: #{w8_linear.1} parent=0 // pred_check
    _
  $region7: #{w8_linear.1} parent=0 // pred_check_branch
    %12 = sbr.rel (0) target = $region9
  $region8: #{w8_linear.1} parent=0 // pred_region
    _
  $region9: #{w8_linear.1} parent=0 // pred_fallthru
    _
  // Predicated region
  $region10: #{w8_linear.1} parent=0 // pred_check
    _
  $region11: #{w8_linear.1} parent=0 // pred_check_branch
    %14 = sbr.rel (0) target = $region13
  $region12: #{w8_linear.1} parent=0 // pred_region
    _
  $region13: #{w8_linear.1} parent=0 // pred_fallthru
    _
  // Predicated region
  $region14: #{w8_linear.1} parent=0 // pred_check
    _
  $region15: #{w8_linear.1} parent=0 // pred_check_branch
    %16 = sbr.rel (0) target = $region17
  $region16: #{w8_linear.1} parent=0 // pred_region
    _
  $region17: #{w8_linear.1} parent=0 // pred_fallthru
    _
  %p17 = scmp.eq.s32.totalorder 0, 0
  // Predicated region
  $region18: #{w8_linear.1} parent=0 // pred_check
    %p18 = pneg %p17
  $region19: #{w8_linear.1} parent=0 // pred_check_branch
    %20 = sbr.rel (%p18) target = $region21
  $region20: #{w8_linear.1} parent=0 // pred_region
    %21 = vst [vmem:[#allocation2] sm:$0xff] 0.0
    %22 = vst [vmem:[#allocation2 + $0x8] sm:$0xff] 0.0
  $region21: #{w8_linear.1} parent=0 // pred_fallthru
    _
  %v23 = vld [vmem:[%s0] sm:$0xff]
  %v24 = vld [vmem:[%s0 + $0x8] sm:$0xff]
  %v25 = vld [vmem:[%s1] sm:$0xff]
  %v26 = vld [vmem:[%s1 + $0x8] sm:$0xff]
  %v27 = vld [vmem:[%s1 + $0x10] sm:$0xff]
  %v28 = vld [vmem:[%s1 + $0x18] sm:$0xff]
  %v29 = vunpack.c.0.s8 %v25
  %v30 = vunpack.c.1.s8 %v25
  %v31 = vunpack.c.2.s8 %v25
  %v32 = vunpack.c.3.s8 %v25
  %v33 = vunpack.c.0.s8 %v26
  %v34 = vunpack.c.1.s8 %v26
  %v35 = vunpack.c.2.s8 %v26
  %v36 = vunpack.c.3.s8 %v26
  %v37 = vunpack.c.0.s8 %v27
  %v38 = vunpack.c.1.s8 %v27
  %v39 = vunpack.c.2.s8 %v27
  %v40 = vunpack.c.3.s8 %v27
  %v41 = vunpack.c.0.s8 %v28
  %v42 = vunpack.c.1.s8 %v28
  %v43 = vunpack.c.2.s8 %v28
  %v44 = vunpack.c.3.s8 %v28
  %v45 = vcvt.s32.f32 %v29
  %v46 = vcvt.s32.f32 %v30
  %v47 = vcvt.s32.f32 %v31
  %v48 = vcvt.s32.f32 %v32
  %v49 = vcvt.s32.f32 %v33
  %v50 = vcvt.s32.f32 %v34
  %v51 = vcvt.s32.f32 %v35
  %v52 = vcvt.s32.f32 %v36
  %v53 = vcvt.s32.f32 %v37
  %v54 = vcvt.s32.f32 %v38
  %v55 = vcvt.s32.f32 %v39
  %v56 = vcvt.s32.f32 %v40
  %v57 = vcvt.s32.f32 %v41
  %v58 = vcvt.s32.f32 %v42
  %v59 = vcvt.s32.f32 %v43
  %v60 = vcvt.s32.f32 %v44
  %v61 = vld [vmem:[#allocation2] sm:$0xff]
  %v62 = vld [vmem:[#allocation2 + $0x8] sm:$0xff]
  %63 = vmatprep.subr.mxu0 0.0
  %64 = vmatpush1.msra.mxu0 %v60
  %65 = vmatprep.subr.mxu0 0.0
  %66 = vmatpush1.msra.mxu0 %v59
  %67 = vmatprep.subr.mxu0 0.0
  %68 = vmatpush1.msra.mxu0 %v58
  %69 = vmatprep.subr.mxu0 0.0
  %70 = vmatpush1.msra.mxu0 %v57
  %71 = vmatprep.subr.mxu0 0.0
  %72 = vmatpush1.msra.mxu0 %v56
  %73 = vmatprep.subr.mxu0 0.0
  %74 = vmatpush1.msra.mxu0 %v55
  %75 = vmatprep.subr.mxu0 0.0
  %76 = vmatpush1.msra.mxu0 %v54
  %77 = vmatprep.subr.mxu0 0.0
  %78 = vmatpush1.msra.mxu0 %v53
  %79 = vmatprep.subr.mxu0 0.0
  %80 = vmatpush1.msra.mxu0 %v52
  %81 = vmatprep.subr.mxu0 0.0
  %82 = vmatpush1.msra.mxu0 %v51
  %83 = vmatprep.subr.mxu0 0.0
  %84 = vmatpush1.msra.mxu0 %v50
  %85 = vmatprep.subr.mxu0 0.0
  %86 = vmatpush1.msra.mxu0 %v49
  %87 = vmatprep.subr.mxu0 0.0
  %88 = vmatpush1.msra.mxu0 %v48
  %89 = vmatprep.subr.mxu0 0.0
  %90 = vmatpush1.msra.mxu0 %v47
  %91 = vmatprep.subr.mxu0 0.0
  %92 = vmatpush1.msra.mxu0 %v46
  %93 = vmatprep.subr.mxu0 0.0
  %94 = vmatpush1.msra.mxu0 %v45
  %95 = vmatprep.subr.mxu0 0.0
  %96 = vmatpush2.msra.mxu0 0.0
  %97 = vmatprep.subr.mxu0 0.0
  %98 = vmatpush2.msra.mxu0 0.0
  %99 = vmatprep.subr.mxu0 0.0
  %100 = vmatpush2.msra.mxu0 0.0
  %101 = vmatprep.subr.mxu0 0.0
  %102 = vmatpush2.msra.mxu0 0.0
  %103 = vmatprep.subr.mxu0 0.0
  %104 = vmatpush2.msra.mxu0 0.0
  %105 = vmatprep.subr.mxu0 0.0
  %106 = vmatpush2.msra.mxu0 0.0
  %107 = vmatprep.subr.mxu0 0.0
  %108 = vmatpush2.msra.mxu0 0.0
  %109 = vmatprep.subr.mxu0 0.0
  %110 = vmatpush2.msra.mxu0 0.0
  %111 = vmatprep.subr.mxu0 0.0
  %112 = vmatpush2.msra.mxu0 0.0
  %113 = vmatprep.subr.mxu0 0.0
  %114 = vmatpush2.msra.mxu0 0.0
  %115 = vmatprep.subr.mxu0 0.0
  %116 = vmatpush2.msra.mxu0 0.0
  %117 = vmatprep.subr.mxu0 0.0
  %118 = vmatpush2.msra.mxu0 0.0
  %119 = vmatprep.subr.mxu0 0.0
  %120 = vmatpush2.msra.mxu0 0.0
  %121 = vmatprep.subr.mxu0 0.0
  %122 = vmatpush2.msra.mxu0 0.0
  %123 = vmatprep.subr.mxu0 0.0
  %124 = vmatpush2.msra.mxu0 0.0
  %125 = vmatprep.subr.mxu0 0.0
  %126 = vmatpush2.msra.mxu0 0.0
  %127 = vmatprep.mubr.f32.mxu0 0.0
  %128 = vmatmul.mubr.f32.gmra.mxu0 %v23
  %v129 = vpop.f32.mrf.mxu0
  %v130 = vadd.f32 0.0, %v129
  %v131 = vpop.f32.mrf.mxu0
  %132 = vmatprep.mubr.f32.mxu0 0.0
  %133 = vmatmul.mubr.f32.gmra.mxu0 %v24
  %v134 = vpop.f32.mrf.mxu0
  %v135 = vadd.f32 0.0, %v134
  %v136 = vpop.f32.mrf.mxu0
  %137 = vdwg.mxu0
  %v138 = vadd.f32 %v61, %v130
  %v139 = vadd.f32 %v62, %v135
  %140 = vst [vmem:[#allocation2] sm:$0xff] %v138
  %141 = vst [vmem:[#allocation2 + $0x8] sm:$0xff] %v139
  // Predicated region
  $region22: #{w8_linear.1} parent=0 // pred_check
    %p142 = pneg %p17
  $region23: #{w8_linear.1} parent=0 // pred_check_branch
    %144 = sbr.rel (%p142) target = $region25
  $region24: #{w8_linear.1} parent=0 // pred_region
    %v145 = vld [vmem:[#allocation2] sm:$0xff]
    %v146 = vld [vmem:[#allocation2 + $0x8] sm:$0xff]
    %v147 = vld [vmem:[%s2] sm:$0x1]
    %v149 = vlaneseq
    %v150 = vshrl.u32 %v149, 7
    %v151 = vsub.s32 0, %v150
    %v152 = vrot.slane %v147, %v151
    %v154 = vmul.f32 %v145, %v152
    %v155 = vmul.f32 %v146, %v152
    %v156 = vld [vmem:[%s3] sm:$0x1]
    %v158 = vlaneseq
    %v159 = vshrl.u32 %v158, 7
    %v160 = vsub.s32 0, %v159
    %v161 = vrot.slane %v156, %v160
    %v163 = vadd.f32 %v154, %v161
    %v164 = vadd.f32 %v155, %v161
    %165 = vst [vmem:[%s4] sm:$0xff] %v163
    %166 = vst [vmem:[%s4 + $0x8] sm:$0xff] %v164
  $region25: #{w8_linear.1} parent=0 // pred_fallthru
    _
  // Predicated region
  $region26: #{w8_linear.1} parent=0 // pred_check
    _
  $region27: #{w8_linear.1} parent=0 // pred_check_branch
    %168 = sbr.rel (0) target = $region29
  $region28: #{w8_linear.1} parent=0 // pred_region
    _
  $region29: #{w8_linear.1} parent=0 // pred_fallthru
    _
  // Predicated region
  $region30: #{w8_linear.1} parent=0 // pred_check
    _
  $region31: #{w8_linear.1} parent=0 // pred_check_branch
    %170 = sbr.rel (0) target = $region33
  $region32: #{w8_linear.1} parent=0 // pred_region
    _
  $region33: #{w8_linear.1} parent=0 // pred_fallthru
    _

</llo_original>
